<compile_context>
chip_gen: v6e
topology: v6e:2x2x1
jax: 0.10.0
libtpu: 0.0.40
codegen_flags: <defaults>
</compile_context>

<pallas_src>
import functools

import jax
import jax.numpy as jnp
from jax.experimental import pallas as pl
from jax.experimental.pallas import tpu as pltpu

# Fixed layer sizes of the PyTorch module.
D_IN, D_H, D_OUT = 2, 128, 2


def mlp_kernel(x_ref, w1_ref, b1_ref, w2_ref, b2_ref, w3_ref, b3_ref, o_ref):
    """Feature-major MLP tile: activations are (features, TB), batch on lanes."""
    x = x_ref[...]                                   # (2, TB)   f32
    w1 = w1_ref[...]                                 # (128, 2)  f32  (out, in)

    # fc1 (K=2): sublane-broadcast FMAs on the VPU. x rows are (1, TB) so they
    # broadcast with stride-0 along sublanes; no per-batch-element lane work.
    h1 = w1[:, 0:1] * x[0:1, :] + w1[:, 1:2] * x[1:2, :] + b1_ref[...]
    h1 = jnp.maximum(h1, 0.0)                        # (128, TB) f32

    # fc2: bf16 operands, f32 MXU accumulation. w2 is (out, in), so
    # dot(w2, h1) contracts the input-feature axis.
    h2 = jnp.dot(w2_ref[...], h1.astype(jnp.bfloat16),
                 preferred_element_type=jnp.float32)
    h2 = jnp.maximum(h2 + b2_ref[...], 0.0)          # (128, TB) f32

    # fc3: bf16 operands, f32 accumulation.
    out = jnp.dot(w3_ref[...], h2.astype(jnp.bfloat16),
                  preferred_element_type=jnp.float32)
    o_ref[...] = (out + b3_ref[...]).astype(o_ref.dtype)   # (2, TB)


def _round_up(n, m):
    return ((n + m - 1) // m) * m


@functools.partial(jax.jit, static_argnames=("block_b",))
def net_forward(x, prepared_params, *, block_b=8192):
    """x: (B, 2) f32. prepared_params: output of prepare_params()."""
    w1, b1, w2, b2, w3, b3 = prepared_params
    B = x.shape[0]

    # Batch tile on the lane axis: multiple of 128, capped at block_b, and
    # sized so the grid has >= 2 tiles when B allows (feeds both v7x TCs).
    tb = min(block_b, max(128, _round_up(pl.cdiv(B, 2), 128)))
    b_pad = _round_up(B, tb)

    # Feature-major (2, b_pad): lane-dense batch axis for DMA and stores.
    xt = jnp.pad(x, ((0, b_pad - B), (0, 0))).T      # (2, b_pad)

    grid = (b_pad // tb,)
    resident = lambda i: (0, 0)   # weights/biases: same block every step -> stay in VMEM

    flops = 2 * b_pad * (D_IN * D_H + D_H * D_H + D_H * D_OUT)
    weight_bytes = (w1.size * 4 + b1.size * 4 + w2.size * 2 + b2.size * 4
                    + w3.size * 2 + b3.size * 4)
    bytes_accessed = b_pad * (D_IN + D_OUT) * 4 + weight_bytes

    out_t = pl.pallas_call(
        mlp_kernel,
        out_shape=jax.ShapeDtypeStruct((D_OUT, b_pad), jnp.float32),
        grid=grid,
        in_specs=[
            pl.BlockSpec((D_IN, tb), lambda i: (0, i)),     # x  (batch-tiled on lanes)
            pl.BlockSpec((D_H, D_IN), resident),            # w1 (128, 2)   f32
            pl.BlockSpec((D_H, 1), resident),               # b1 (128, 1)   f32
            pl.BlockSpec((D_H, D_H), resident),             # w2 (128, 128) bf16
            pl.BlockSpec((D_H, 1), resident),               # b2 (128, 1)   f32
            pl.BlockSpec((D_OUT, D_H), resident),           # w3 (2, 128)   bf16
            pl.BlockSpec((D_OUT, 1), resident),             # b3 (2, 1)     f32
        ],
        out_specs=pl.BlockSpec((D_OUT, tb), lambda i: (0, i)),
        compiler_params=pltpu.CompilerParams(
            dimension_semantics=("parallel",),              # shard batch tiles across TCs
            vmem_limit_bytes=48 * 1024 * 1024,              # headroom vs v7x's 64 MiB
        ),
        cost_estimate=pl.CostEstimate(
            flops=flops, transcendentals=0, bytes_accessed=bytes_accessed),
    )(xt, w1, b1, w2, b2, w3, b3)

    return out_t[:, :B].T                                   # (B, 2)


def init_params(key):
    """PyTorch nn.Linear-style init: weight (out, in) and bias (out,) drawn
    from U(-1/sqrt(fan_in), 1/sqrt(fan_in))."""
    def linear(key, fan_in, fan_out):
        kw, kb = jax.random.split(key)
        bound = 1.0 / jnp.sqrt(fan_in)
        w = jax.random.uniform(kw, (fan_out, fan_in), jnp.float32, -bound, bound)
        b = jax.random.uniform(kb, (fan_out,), jnp.float32, -bound, bound)
        return w, b

    k1, k2, k3 = jax.random.split(key, 3)
    w1, b1 = linear(k1, D_IN, D_H)
    w2, b2 = linear(k2, D_H, D_H)
    w3, b3 = linear(k3, D_H, D_OUT)
    return (w1, b1, w2, b2, w3, b3)


def prepare_params(params):
    """One-time, out-of-the-hot-path prep: keep (out, in) layout, cast fc2/fc3
    weights to bf16 (intentional bf16-operand / f32-accumulate matmuls), and
    reshape biases to (out, 1) for lane-broadcast in the feature-major kernel."""
    w1, b1, w2, b2, w3, b3 = params
    return (w1.astype(jnp.float32), b1.reshape(-1, 1).astype(jnp.float32),
            w2.astype(jnp.bfloat16), b2.reshape(-1, 1).astype(jnp.float32),
            w3.astype(jnp.bfloat16), b3.reshape(-1, 1).astype(jnp.float32))


def net_reference_f32(x, params):
    """Pure f32 reference (matches the PyTorch module up to bf16 error)."""
    w1, b1, w2, b2, w3, b3 = params
    h1 = jnp.maximum(x @ w1.T + b1, 0.0)
    h2 = jnp.maximum(h1 @ w2.T + b2, 0.0)
    return h2 @ w3.T + b3


def net_reference_bf16(x, params):
    """Mirrors the kernel's bf16-operand / f32-accumulate fc2/fc3 matmuls."""
    w1, b1, w2, b2, w3, b3 = params
    h1 = jnp.maximum(x @ w1.T + b1, 0.0)
    h2 = jnp.dot(h1.astype(jnp.bfloat16), w2.T.astype(jnp.bfloat16),
                 preferred_element_type=jnp.float32)
    h2 = jnp.maximum(h2 + b2, 0.0)
    out = jnp.dot(h2.astype(jnp.bfloat16), w3.T.astype(jnp.bfloat16),
                  preferred_element_type=jnp.float32)
    return out + b3


if __name__ == "__main__":
    key = jax.random.PRNGKey(0)
    kp, kx1, kx2 = jax.random.split(key, 3)
    params = init_params(kp)
    prepared = prepare_params(params)

    # Point-cloud style input: small batch of 2-D points.
    B = 8
    x = jax.random.normal(kx1, (B, 2), dtype=jnp.float32)
    out = jax.block_until_ready(net_forward(x, prepared))
    assert out.shape == (B, 2), out.shape
    assert jnp.allclose(out, net_reference_bf16(x, params), atol=1e-3, rtol=1e-3), \
        "mismatch vs bf16 reference"
    assert jnp.allclose(out, net_reference_f32(x, params), atol=5e-2, rtol=5e-2), \
        "mismatch vs f32 reference"

    # Ragged batch: exercises padding and a multi-tile (>=2 steps) grid.
    B2 = 300
    x2 = jax.random.normal(kx2, (B2, 2), dtype=jnp.float32)
    out2 = jax.block_until_ready(net_forward(x2, prepared))
    assert out2.shape == (B2, 2), out2.shape
    assert jnp.allclose(out2, net_reference_bf16(x2, params), atol=1e-3, rtol=1e-3), \
        "mismatch vs bf16 reference (ragged batch)"
    assert jnp.allclose(out2, net_reference_f32(x2, params), atol=5e-2, rtol=5e-2), \
        "mismatch vs f32 reference (ragged batch)"

    print("KERNEL_OK")
</pallas_src>

<mosaic_0001>
module attributes {stable_mosaic.version = 11 : i64} {
  func.func @mlp_kernel(%arg0: i32, %arg1: memref<2x128xf32, #tpu.memory_space<vmem>>, %arg2: memref<128x2xf32, #tpu.memory_space<vmem>>, %arg3: memref<128x1xf32, #tpu.memory_space<vmem>>, %arg4: memref<128x128xbf16, #tpu.memory_space<vmem>>, %arg5: memref<128x1xf32, #tpu.memory_space<vmem>>, %arg6: memref<2x128xbf16, #tpu.memory_space<vmem>>, %arg7: memref<2x1xf32, #tpu.memory_space<vmem>>, %arg8: memref<2x128xf32, #tpu.memory_space<vmem>>) attributes {dimension_semantics = [#tpu.dimension_semantics<parallel>], iteration_bounds = array<i64: 1>, scalar_prefetch = 0 : i64, scratch_operands = 0 : i64, tpu.core_type = #tpu.core_type<tc>, window_params = [{transform_indices = @transform_0, window_bounds = array<i64: 2, 128>}, {pipeline_mode = #tpu.pipeline_mode<synchronous>, transform_indices = @transform_1, window_bounds = array<i64: 128, 2>}, {pipeline_mode = #tpu.pipeline_mode<synchronous>, transform_indices = @transform_2, window_bounds = array<i64: 128, 1>}, {pipeline_mode = #tpu.pipeline_mode<synchronous>, transform_indices = @transform_3, window_bounds = array<i64: 128, 128>}, {pipeline_mode = #tpu.pipeline_mode<synchronous>, transform_indices = @transform_4, window_bounds = array<i64: 128, 1>}, {pipeline_mode = #tpu.pipeline_mode<synchronous>, transform_indices = @transform_5, window_bounds = array<i64: 2, 128>}, {pipeline_mode = #tpu.pipeline_mode<synchronous>, transform_indices = @transform_6, window_bounds = array<i64: 2, 1>}, {transform_indices = @transform_7, window_bounds = array<i64: 2, 128>}]} {
    %c0 = arith.constant 0 : index
    %c0_0 = arith.constant 0 : index
    %0 = vector.load %arg1[%c0, %c0_0] : memref<2x128xf32, #tpu.memory_space<vmem>>, vector<2x128xf32>
    %c0_1 = arith.constant 0 : index
    %c0_2 = arith.constant 0 : index
    %1 = vector.load %arg2[%c0_1, %c0_2] : memref<128x2xf32, #tpu.memory_space<vmem>>, vector<128x2xf32>
    %2 = vector.extract_strided_slice %1 {offsets = [0, 0], sizes = [128, 1], strides = [1, 1]} : vector<128x2xf32> to vector<128x1xf32>
    %3 = vector.extract_strided_slice %0 {offsets = [0, 0], sizes = [1, 128], strides = [1, 1]} : vector<2x128xf32> to vector<1x128xf32>
    %4 = vector.broadcast %2 : vector<128x1xf32> to vector<128x128xf32>
    %5 = vector.broadcast %3 : vector<1x128xf32> to vector<128x128xf32>
    %6 = arith.mulf %4, %5 : vector<128x128xf32>
    %7 = vector.extract_strided_slice %1 {offsets = [0, 1], sizes = [128, 1], strides = [1, 1]} : vector<128x2xf32> to vector<128x1xf32>
    %8 = vector.extract_strided_slice %0 {offsets = [1, 0], sizes = [1, 128], strides = [1, 1]} : vector<2x128xf32> to vector<1x128xf32>
    %9 = vector.broadcast %7 : vector<128x1xf32> to vector<128x128xf32>
    %10 = vector.broadcast %8 : vector<1x128xf32> to vector<128x128xf32>
    %11 = arith.mulf %9, %10 : vector<128x128xf32>
    %12 = arith.addf %6, %11 : vector<128x128xf32>
    %c0_3 = arith.constant 0 : index
    %c0_4 = arith.constant 0 : index
    %13 = vector.load %arg3[%c0_3, %c0_4] : memref<128x1xf32, #tpu.memory_space<vmem>>, vector<128x1xf32>
    %14 = vector.broadcast %13 : vector<128x1xf32> to vector<128x128xf32>
    %15 = arith.addf %12, %14 : vector<128x128xf32>
    %cst = arith.constant 0.000000e+00 : f32
    %16 = vector.broadcast %cst : f32 to vector<128x128xf32>
    %17 = arith.maximumf %15, %16 : vector<128x128xf32>
    %c0_5 = arith.constant 0 : index
    %c0_6 = arith.constant 0 : index
    %18 = vector.load %arg4[%c0_5, %c0_6] : memref<128x128xbf16, #tpu.memory_space<vmem>>, vector<128x128xbf16>
    %19 = arith.truncf %17 : vector<128x128xf32> to vector<128x128xbf16>
    %cst_7 = arith.constant dense<0.000000e+00> : vector<128x128xf32>
    %20 = tpu.matmul %18, %19, %cst_7 {dimension_numbers = #tpu.dot_dimension_numbers<[1], [0], [0], [1], [0, 0, 1, 1], [], []>} : vector<128x128xbf16>, vector<128x128xbf16>, vector<128x128xf32> -> vector<128x128xf32>
    %c0_8 = arith.constant 0 : index
    %c0_9 = arith.constant 0 : index
    %21 = vector.load %arg5[%c0_8, %c0_9] : memref<128x1xf32, #tpu.memory_space<vmem>>, vector<128x1xf32>
    %22 = vector.broadcast %21 : vector<128x1xf32> to vector<128x128xf32>
    %23 = arith.addf %20, %22 : vector<128x128xf32>
    %cst_10 = arith.constant 0.000000e+00 : f32
    %24 = vector.broadcast %cst_10 : f32 to vector<128x128xf32>
    %25 = arith.maximumf %23, %24 : vector<128x128xf32>
    %c0_11 = arith.constant 0 : index
    %c0_12 = arith.constant 0 : index
    %26 = vector.load %arg6[%c0_11, %c0_12] : memref<2x128xbf16, #tpu.memory_space<vmem>>, vector<2x128xbf16>
    %27 = arith.truncf %25 : vector<128x128xf32> to vector<128x128xbf16>
    %cst_13 = arith.constant dense<0.000000e+00> : vector<2x128xf32>
    %28 = tpu.matmul %26, %27, %cst_13 {dimension_numbers = #tpu.dot_dimension_numbers<[1], [0], [0], [1], [0, 0, 1, 1], [], []>} : vector<2x128xbf16>, vector<128x128xbf16>, vector<2x128xf32> -> vector<2x128xf32>
    %c0_14 = arith.constant 0 : index
    %c0_15 = arith.constant 0 : index
    %29 = vector.load %arg7[%c0_14, %c0_15] : memref<2x1xf32, #tpu.memory_space<vmem>>, vector<2x1xf32>
    %30 = vector.broadcast %29 : vector<2x1xf32> to vector<2x128xf32>
    %31 = arith.addf %28, %30 : vector<2x128xf32>
    %c0_16 = arith.constant 0 : index
    %c0_17 = arith.constant 0 : index
    %32 = vector.load %arg8[%c0_16, %c0_17] : memref<2x128xf32, #tpu.memory_space<vmem>>, vector<2x128xf32>
    tpu.vector_store %arg8[%c0_16, %c0_17], %31 {strides = array<i32>} : memref<2x128xf32, #tpu.memory_space<vmem>>, vector<2x128xf32>,
    return
  }
  func.func @transform_0(%arg0: i32) -> (i32, i32) {
    %c0_i32 = arith.constant 0 : i32
    %c0_i32_0 = arith.constant 0 : i32
    return %c0_i32, %arg0 : i32, i32
  }
  func.func @transform_1(%arg0: i32) -> (i32, i32) {
    %c0_i32 = arith.constant 0 : i32
    %c0_i32_0 = arith.constant 0 : i32
    %c0_i32_1 = arith.constant 0 : i32
    return %c0_i32, %c0_i32_0 : i32, i32
  }
  func.func @transform_2(%arg0: i32) -> (i32, i32) {
    %c0_i32 = arith.constant 0 : i32
    %c0_i32_0 = arith.constant 0 : i32
    %c0_i32_1 = arith.constant 0 : i32
    return %c0_i32, %c0_i32_0 : i32, i32
  }
  func.func @transform_3(%arg0: i32) -> (i32, i32) {
    %c0_i32 = arith.constant 0 : i32
    %c0_i32_0 = arith.constant 0 : i32
    %c0_i32_1 = arith.constant 0 : i32
    return %c0_i32, %c0_i32_0 : i32, i32
  }
  func.func @transform_4(%arg0: i32) -> (i32, i32) {
    %c0_i32 = arith.constant 0 : i32
    %c0_i32_0 = arith.constant 0 : i32
    %c0_i32_1 = arith.constant 0 : i32
    return %c0_i32, %c0_i32_0 : i32, i32
  }
  func.func @transform_5(%arg0: i32) -> (i32, i32) {
    %c0_i32 = arith.constant 0 : i32
    %c0_i32_0 = arith.constant 0 : i32
    %c0_i32_1 = arith.constant 0 : i32
    return %c0_i32, %c0_i32_0 : i32, i32
  }
  func.func @transform_6(%arg0: i32) -> (i32, i32) {
    %c0_i32 = arith.constant 0 : i32
    %c0_i32_0 = arith.constant 0 : i32
    %c0_i32_1 = arith.constant 0 : i32
    return %c0_i32, %c0_i32_0 : i32, i32
  }
  func.func @transform_7(%arg0: i32) -> (i32, i32) {
    %c0_i32 = arith.constant 0 : i32
    %c0_i32_0 = arith.constant 0 : i32
    return %c0_i32, %arg0 : i32, i32
  }
}

</mosaic_0001>

<llo_original>
// kernel: net_forward.1
$region0: #{net_forward.1}
  #allocation0 [shape = 'u32[]', space=smem, size = 0x4, offset = 0x4, fixed_abs, tag = 'smem constant byte address 0x4 - core index']
  #allocation1 [shape = 'u32[144,128]{1,0:T(1,128)}', space=vmem, size = 0x12000, scoped, tag = 'internal scratch']
  %s0 = inlined_call_operand.vmem [shape: f32[2,128], index: 0, kind: input, shape index: {}]
  %s1 = inlined_call_operand.vmem [shape: f32[128,2], index: 1, kind: input, shape index: {}]
  %s2 = inlined_call_operand.vmem [shape: f32[128,1], index: 2, kind: input, shape index: {}]
  %s3 = inlined_call_operand.vmem [shape: bf16[128,128], index: 3, kind: input, shape index: {}]
  %s4 = inlined_call_operand.vmem [shape: f32[128,1], index: 4, kind: input, shape index: {}]
  %s5 = inlined_call_operand.vmem [shape: bf16[2,128], index: 5, kind: input, shape index: {}]
  %s6 = inlined_call_operand.vmem [shape: f32[2,1], index: 6, kind: input, shape index: {}]
  %s7 = inlined_call_operand.vmem [shape: f32[2,128], index: 7, kind: output, shape index: {}]
  %s8 = sld [smem:[#allocation0]]
  $region38: #{net_forward.1} parent=0
    _
  %s10 = ssub.s32 1, %s8
  %s11 = scalar_select 0, %s10, %s8
  // Predicated region
  $region2: #{net_forward.1} parent=0 // pred_check
    _
  $region3: #{net_forward.1} parent=0 // pred_check_branch
    %13 = sbr.rel (0) target = $region5
  $region4: #{net_forward.1} parent=0 // pred_region
    _
  $region5: #{net_forward.1} parent=0 // pred_fallthru
    _
  // Predicated region
  $region6: #{net_forward.1} parent=0 // pred_check
    _
  $region7: #{net_forward.1} parent=0 // pred_check_branch
    %15 = sbr.rel (0) target = $region9
  $region8: #{net_forward.1} parent=0 // pred_region
    _
  $region9: #{net_forward.1} parent=0 // pred_fallthru
    _
  // Predicated region
  $region10: #{net_forward.1} parent=0 // pred_check
    _
  $region11: #{net_forward.1} parent=0 // pred_check_branch
    %17 = sbr.rel (0) target = $region13
  $region12: #{net_forward.1} parent=0 // pred_region
    _
  $region13: #{net_forward.1} parent=0 // pred_fallthru
    _
  // Predicated region
  $region14: #{net_forward.1} parent=0 // pred_check
    _
  $region15: #{net_forward.1} parent=0 // pred_check_branch
    %19 = sbr.rel (0) target = $region17
  $region16: #{net_forward.1} parent=0 // pred_region
    _
  $region17: #{net_forward.1} parent=0 // pred_fallthru
    _
  // Predicated region
  $region18: #{net_forward.1} parent=0 // pred_check
    _
  $region19: #{net_forward.1} parent=0 // pred_check_branch
    %21 = sbr.rel (0) target = $region21
  $region20: #{net_forward.1} parent=0 // pred_region
    _
  $region21: #{net_forward.1} parent=0 // pred_fallthru
    _
  // Predicated region
  $region22: #{net_forward.1} parent=0 // pred_check
    _
  $region23: #{net_forward.1} parent=0 // pred_check_branch
    %23 = sbr.rel (0) target = $region25
  $region24: #{net_forward.1} parent=0 // pred_region
    _
  $region25: #{net_forward.1} parent=0 // pred_fallthru
    _
  // Predicated region
  $region26: #{net_forward.1} parent=0 // pred_check
    _
  $region27: #{net_forward.1} parent=0 // pred_check_branch
    %25 = sbr.rel (0) target = $region29
  $region28: #{net_forward.1} parent=0 // pred_region
    _
  $region29: #{net_forward.1} parent=0 // pred_fallthru
    _
  %v27 = vld [vmem:[%s0] sm:$0x3]
  %v28 = vld [vmem:[%s1] sm:$0xff]
  %v29 = vld [vmem:[%s1 + $0x8] sm:$0xff]
  %v30 = vld [vmem:[%s1 + $0x10] sm:$0xff]
  %v31 = vld [vmem:[%s1 + $0x18] sm:$0xff]
  %v32 = vld [vmem:[%s1 + $0x20] sm:$0xff]
  %v33 = vld [vmem:[%s1 + $0x28] sm:$0xff]
  %v34 = vld [vmem:[%s1 + $0x30] sm:$0xff]
  %v35 = vld [vmem:[%s1 + $0x38] sm:$0xff]
  %v36 = vld [vmem:[%s1 + $0x40] sm:$0xff]
  %v37 = vld [vmem:[%s1 + $0x48] sm:$0xff]
  %v38 = vld [vmem:[%s1 + $0x50] sm:$0xff]
  %v39 = vld [vmem:[%s1 + $0x58] sm:$0xff]
  %v40 = vld [vmem:[%s1 + $0x60] sm:$0xff]
  %v41 = vld [vmem:[%s1 + $0x68] sm:$0xff]
  %v42 = vld [vmem:[%s1 + $0x70] sm:$0xff]
  %v43 = vld [vmem:[%s1 + $0x78] sm:$0xff]
  %45 = vset.pattern.permute.xlu0 0
  %46 = vperm.xlu0 %45, %v28
  %v47 = vpop.permute.xlu0 %46
  %50 = vset.pattern.permute.xlu0 0
  %51 = vperm.xlu0 %50, %v29
  %v52 = vpop.permute.xlu0 %51
  %55 = vset.pattern.permute.xlu0 0
  %56 = vperm.xlu0 %55, %v30
  %v57 = vpop.permute.xlu0 %56
  %60 = vset.pattern.permute.xlu0 0
  %61 = vperm.xlu0 %60, %v31
  %v62 = vpop.permute.xlu0 %61
  %65 = vset.pattern.permute.xlu0 0
  %66 = vperm.xlu0 %65, %v32
  %v67 = vpop.permute.xlu0 %66
  %70 = vset.pattern.permute.xlu0 0
  %71 = vperm.xlu0 %70, %v33
  %v72 = vpop.permute.xlu0 %71
  %75 = vset.pattern.permute.xlu0 0
  %76 = vperm.xlu0 %75, %v34
  %v77 = vpop.permute.xlu0 %76
  %80 = vset.pattern.permute.xlu0 0
  %81 = vperm.xlu0 %80, %v35
  %v82 = vpop.permute.xlu0 %81
  %85 = vset.pattern.permute.xlu0 0
  %86 = vperm.xlu0 %85, %v36
  %v87 = vpop.permute.xlu0 %86
  %90 = vset.pattern.permute.xlu0 0
  %91 = vperm.xlu0 %90, %v37
  %v92 = vpop.permute.xlu0 %91
  %95 = vset.pattern.permute.xlu0 0
  %96 = vperm.xlu0 %95, %v38
  %v97 = vpop.permute.xlu0 %96
  %100 = vset.pattern.permute.xlu0 0
  %101 = vperm.xlu0 %100, %v39
  %v102 = vpop.permute.xlu0 %101
  %105 = vset.pattern.permute.xlu0 0
  %106 = vperm.xlu0 %105, %v40
  %v107 = vpop.permute.xlu0 %106
  %110 = vset.pattern.permute.xlu0 0
  %111 = vperm.xlu0 %110, %v41
  %v112 = vpop.permute.xlu0 %111
  %115 = vset.pattern.permute.xlu0 0
  %116 = vperm.xlu0 %115, %v42
  %v117 = vpop.permute.xlu0 %116
  %120 = vset.pattern.permute.xlu0 0
  %121 = vperm.xlu0 %120, %v43
  %v122 = vpop.permute.xlu0 %121
  %v124 = vlaneseq
  %v125 = vshrl.u32 %v124, 7
  %v126 = vsub.s32 0, %v125
  %v127 = vrot.slane %v27, %v126
  %v128 = vmul.f32 %v47, %v127
  %v129 = vmul.f32 %v52, %v127
  %v130 = vmul.f32 %v57, %v127
  %v131 = vmul.f32 %v62, %v127
  %v132 = vmul.f32 %v67, %v127
  %v133 = vmul.f32 %v72, %v127
  %v134 = vmul.f32 %v77, %v127
  %v135 = vmul.f32 %v82, %v127
  %v136 = vmul.f32 %v87, %v127
  %v137 = vmul.f32 %v92, %v127
  %v138 = vmul.f32 %v97, %v127
  %v139 = vmul.f32 %v102, %v127
  %v140 = vmul.f32 %v107, %v127
  %v141 = vmul.f32 %v112, %v127
  %v142 = vmul.f32 %v117, %v127
  %v143 = vmul.f32 %v122, %v127
  %144 = vset.pattern.permute.xlu0 1
  %145 = vperm.xlu0 %144, %v28
  %v146 = vpop.permute.xlu0 %145
  %148 = vset.pattern.permute.xlu0 1
  %149 = vperm.xlu0 %148, %v29
  %v150 = vpop.permute.xlu0 %149
  %152 = vset.pattern.permute.xlu0 1
  %153 = vperm.xlu0 %152, %v30
  %v154 = vpop.permute.xlu0 %153
  %156 = vset.pattern.permute.xlu0 1
  %157 = vperm.xlu0 %156, %v31
  %v158 = vpop.permute.xlu0 %157
  %160 = vset.pattern.permute.xlu0 1
  %161 = vperm.xlu0 %160, %v32
  %v162 = vpop.permute.xlu0 %161
  %164 = vset.pattern.permute.xlu0 1
  %165 = vperm.xlu0 %164, %v33
  %v166 = vpop.permute.xlu0 %165
  %168 = vset.pattern.permute.xlu0 1
  %169 = vperm.xlu0 %168, %v34
  %v170 = vpop.permute.xlu0 %169
  %172 = vset.pattern.permute.xlu0 1
  %173 = vperm.xlu0 %172, %v35
  %v174 = vpop.permute.xlu0 %173
  %176 = vset.pattern.permute.xlu0 1
  %177 = vperm.xlu0 %176, %v36
  %v178 = vpop.permute.xlu0 %177
  %180 = vset.pattern.permute.xlu0 1
  %181 = vperm.xlu0 %180, %v37
  %v182 = vpop.permute.xlu0 %181
  %184 = vset.pattern.permute.xlu0 1
  %185 = vperm.xlu0 %184, %v38
  %v186 = vpop.permute.xlu0 %185
  %188 = vset.pattern.permute.xlu0 1
  %189 = vperm.xlu0 %188, %v39
  %v190 = vpop.permute.xlu0 %189
  %192 = vset.pattern.permute.xlu0 1
  %193 = vperm.xlu0 %192, %v40
  %v194 = vpop.permute.xlu0 %193
  %196 = vset.pattern.permute.xlu0 1
  %197 = vperm.xlu0 %196, %v41
  %v198 = vpop.permute.xlu0 %197
  %200 = vset.pattern.permute.xlu0 1
  %201 = vperm.xlu0 %200, %v42
  %v202 = vpop.permute.xlu0 %201
  %204 = vset.pattern.permute.xlu0 1
  %205 = vperm.xlu0 %204, %v43
  %v206 = vpop.permute.xlu0 %205
  %v208 = vlaneseq
  %v209 = vshrl.u32 %v208, 7
  %v210 = vsub.s32 1, %v209
  %v211 = vrot.slane %v27, %v210
  %v212 = vmul.f32 %v146, %v211
  %v213 = vmul.f32 %v150, %v211
  %v214 = vmul.f32 %v154, %v211
  %v215 = vmul.f32 %v158, %v211
  %v216 = vmul.f32 %v162, %v211
  %v217 = vmul.f32 %v166, %v211
  %v218 = vmul.f32 %v170, %v211
  %v219 = vmul.f32 %v174, %v211
  %v220 = vmul.f32 %v178, %v211
  %v221 = vmul.f32 %v182, %v211
  %v222 = vmul.f32 %v186, %v211
  %v223 = vmul.f32 %v190, %v211
  %v224 = vmul.f32 %v194, %v211
  %v225 = vmul.f32 %v198, %v211
  %v226 = vmul.f32 %v202, %v211
  %v227 = vmul.f32 %v206, %v211
  %v228 = vadd.f32 %v128, %v212
  %v229 = vadd.f32 %v129, %v213
  %v230 = vadd.f32 %v130, %v214
  %v231 = vadd.f32 %v131, %v215
  %v232 = vadd.f32 %v132, %v216
  %v233 = vadd.f32 %v133, %v217
  %v234 = vadd.f32 %v134, %v218
  %v235 = vadd.f32 %v135, %v219
  %v236 = vadd.f32 %v136, %v220
  %v237 = vadd.f32 %v137, %v221
  %v238 = vadd.f32 %v138, %v222
  %v239 = vadd.f32 %v139, %v223
  %v240 = vadd.f32 %v140, %v224
  %v241 = vadd.f32 %v141, %v225
  %v242 = vadd.f32 %v142, %v226
  %v243 = vadd.f32 %v143, %v227
  %v244 = vld [vmem:[%s2] sm:$0xff]
  %v245 = vld [vmem:[%s2 + $0x8] sm:$0xff]
  %v246 = vld [vmem:[%s2 + $0x10] sm:$0xff]
  %v247 = vld [vmem:[%s2 + $0x18] sm:$0xff]
  %v248 = vld [vmem:[%s2 + $0x20] sm:$0xff]
  %v249 = vld [vmem:[%s2 + $0x28] sm:$0xff]
  %v250 = vld [vmem:[%s2 + $0x30] sm:$0xff]
  %v251 = vld [vmem:[%s2 + $0x38] sm:$0xff]
  %v252 = vld [vmem:[%s2 + $0x40] sm:$0xff]
  %v253 = vld [vmem:[%s2 + $0x48] sm:$0xff]
  %v254 = vld [vmem:[%s2 + $0x50] sm:$0xff]
  %v255 = vld [vmem:[%s2 + $0x58] sm:$0xff]
  %v256 = vld [vmem:[%s2 + $0x60] sm:$0xff]
  %v257 = vld [vmem:[%s2 + $0x68] sm:$0xff]
  %v258 = vld [vmem:[%s2 + $0x70] sm:$0xff]
  %v259 = vld [vmem:[%s2 + $0x78] sm:$0xff]
  %261 = vset.pattern.permute.xlu0 0
  %262 = vperm.xlu0 %261, %v244
  %v263 = vpop.permute.xlu0 %262
  %266 = vset.pattern.permute.xlu0 0
  %267 = vperm.xlu0 %266, %v245
  %v268 = vpop.permute.xlu0 %267
  %271 = vset.pattern.permute.xlu0 0
  %272 = vperm.xlu0 %271, %v246
  %v273 = vpop.permute.xlu0 %272
  %276 = vset.pattern.permute.xlu0 0
  %277 = vperm.xlu0 %276, %v247
  %v278 = vpop.permute.xlu0 %277
  %281 = vset.pattern.permute.xlu0 0
  %282 = vperm.xlu0 %281, %v248
  %v283 = vpop.permute.xlu0 %282
  %286 = vset.pattern.permute.xlu0 0
  %287 = vperm.xlu0 %286, %v249
  %v288 = vpop.permute.xlu0 %287
  %291 = vset.pattern.permute.xlu0 0
  %292 = vperm.xlu0 %291, %v250
  %v293 = vpop.permute.xlu0 %292
  %296 = vset.pattern.permute.xlu0 0
  %297 = vperm.xlu0 %296, %v251
  %v298 = vpop.permute.xlu0 %297
  %301 = vset.pattern.permute.xlu0 0
  %302 = vperm.xlu0 %301, %v252
  %v303 = vpop.permute.xlu0 %302
  %306 = vset.pattern.permute.xlu0 0
  %307 = vperm.xlu0 %306, %v253
  %v308 = vpop.permute.xlu0 %307
  %311 = vset.pattern.permute.xlu0 0
  %312 = vperm.xlu0 %311, %v254
  %v313 = vpop.permute.xlu0 %312
  %316 = vset.pattern.permute.xlu0 0
  %317 = vperm.xlu0 %316, %v255
  %v318 = vpop.permute.xlu0 %317
  %321 = vset.pattern.permute.xlu0 0
  %322 = vperm.xlu0 %321, %v256
  %v323 = vpop.permute.xlu0 %322
  %326 = vset.pattern.permute.xlu0 0
  %327 = vperm.xlu0 %326, %v257
  %v328 = vpop.permute.xlu0 %327
  %331 = vset.pattern.permute.xlu0 0
  %332 = vperm.xlu0 %331, %v258
  %v333 = vpop.permute.xlu0 %332
  %336 = vset.pattern.permute.xlu0 0
  %337 = vperm.xlu0 %336, %v259
  %v338 = vpop.permute.xlu0 %337
  %v340 = vadd.f32 %v228, %v263
  %v341 = vadd.f32 %v229, %v268
  %v342 = vadd.f32 %v230, %v273
  %v343 = vadd.f32 %v231, %v278
  %v344 = vadd.f32 %v232, %v283
  %v345 = vadd.f32 %v233, %v288
  %v346 = vadd.f32 %v234, %v293
  %v347 = vadd.f32 %v235, %v298
  %v348 = vadd.f32 %v236, %v303
  %v349 = vadd.f32 %v237, %v308
  %v350 = vadd.f32 %v238, %v313
  %v351 = vadd.f32 %v239, %v318
  %v352 = vadd.f32 %v240, %v323
  %v353 = vadd.f32 %v241, %v328
  %v354 = vadd.f32 %v242, %v333
  %v355 = vadd.f32 %v243, %v338
  %v356 = vmax.f32 %v340, 0.0
  %v357 = vmax.f32 %v341, 0.0
  %v358 = vmax.f32 %v342, 0.0
  %v359 = vmax.f32 %v343, 0.0
  %v360 = vmax.f32 %v344, 0.0
  %v361 = vmax.f32 %v345, 0.0
  %v362 = vmax.f32 %v346, 0.0
  %v363 = vmax.f32 %v347, 0.0
  %v364 = vmax.f32 %v348, 0.0
  %v365 = vmax.f32 %v349, 0.0
  %v366 = vmax.f32 %v350, 0.0
  %v367 = vmax.f32 %v351, 0.0
  %v368 = vmax.f32 %v352, 0.0
  %v369 = vmax.f32 %v353, 0.0
  %v370 = vmax.f32 %v354, 0.0
  %v371 = vmax.f32 %v355, 0.0
  %v372 = vld [vmem:[%s3] sm:$0xf]
  %v373 = vld [vmem:[%s3 + $0x4] sm:$0xf]
  %v374 = vld [vmem:[%s3 + $0x8] sm:$0xf]
  %v375 = vld [vmem:[%s3 + $0xc] sm:$0xf]
  %v376 = vld [vmem:[%s3 + $0x10] sm:$0xf]
  %v377 = vld [vmem:[%s3 + $0x14] sm:$0xf]
  %v378 = vld [vmem:[%s3 + $0x18] sm:$0xf]
  %v379 = vld [vmem:[%s3 + $0x1c] sm:$0xf]
  %v380 = vld [vmem:[%s3 + $0x20] sm:$0xf]
  %v381 = vld [vmem:[%s3 + $0x24] sm:$0xf]
  %v382 = vld [vmem:[%s3 + $0x28] sm:$0xf]
  %v383 = vld [vmem:[%s3 + $0x2c] sm:$0xf]
  %v384 = vld [vmem:[%s3 + $0x30] sm:$0xf]
  %v385 = vld [vmem:[%s3 + $0x34] sm:$0xf]
  %v386 = vld [vmem:[%s3 + $0x38] sm:$0xf]
  %v387 = vld [vmem:[%s3 + $0x3c] sm:$0xf]
  %v388 = vpack.c.bf16 %v357, %v356
  %v389 = vpack.c.bf16 %v359, %v358
  %v390 = vpack.c.bf16 %v361, %v360
  %v391 = vpack.c.bf16 %v363, %v362
  %v392 = vpack.c.bf16 %v365, %v364
  %v393 = vpack.c.bf16 %v367, %v366
  %v394 = vpack.c.bf16 %v369, %v368
  %v395 = vpack.c.bf16 %v371, %v370
  %v396 = vld [vmem:[%s4] sm:$0xff]
  %v397 = vld [vmem:[%s4 + $0x8] sm:$0xff]
  %v398 = vld [vmem:[%s4 + $0x10] sm:$0xff]
  %v399 = vld [vmem:[%s4 + $0x18] sm:$0xff]
  %v400 = vld [vmem:[%s4 + $0x20] sm:$0xff]
  %v401 = vld [vmem:[%s4 + $0x28] sm:$0xff]
  %v402 = vld [vmem:[%s4 + $0x30] sm:$0xff]
  %v403 = vld [vmem:[%s4 + $0x38] sm:$0xff]
  %v404 = vld [vmem:[%s4 + $0x40] sm:$0xff]
  %v405 = vld [vmem:[%s4 + $0x48] sm:$0xff]
  %v406 = vld [vmem:[%s4 + $0x50] sm:$0xff]
  %v407 = vld [vmem:[%s4 + $0x58] sm:$0xff]
  %v408 = vld [vmem:[%s4 + $0x60] sm:$0xff]
  %v409 = vld [vmem:[%s4 + $0x68] sm:$0xff]
  %v410 = vld [vmem:[%s4 + $0x70] sm:$0xff]
  %v411 = vld [vmem:[%s4 + $0x78] sm:$0xff]
  %413 = vset.pattern.permute.xlu0 0
  %414 = vperm.xlu0 %413, %v396
  %v415 = vpop.permute.xlu0 %414
  %418 = vset.pattern.permute.xlu0 0
  %419 = vperm.xlu0 %418, %v397
  %v420 = vpop.permute.xlu0 %419
  %423 = vset.pattern.permute.xlu0 0
  %424 = vperm.xlu0 %423, %v398
  %v425 = vpop.permute.xlu0 %424
  %428 = vset.pattern.permute.xlu0 0
  %429 = vperm.xlu0 %428, %v399
  %v430 = vpop.permute.xlu0 %429
  %433 = vset.pattern.permute.xlu0 0
  %434 = vperm.xlu0 %433, %v400
  %v435 = vpop.permute.xlu0 %434
  %438 = vset.pattern.permute.xlu0 0
  %439 = vperm.xlu0 %438, %v401
  %v440 = vpop.permute.xlu0 %439
  %443 = vset.pattern.permute.xlu0 0
  %444 = vperm.xlu0 %443, %v402
  %v445 = vpop.permute.xlu0 %444
  %448 = vset.pattern.permute.xlu0 0
  %449 = vperm.xlu0 %448, %v403
  %v450 = vpop.permute.xlu0 %449
  %453 = vset.pattern.permute.xlu0 0
  %454 = vperm.xlu0 %453, %v404
  %v455 = vpop.permute.xlu0 %454
  %458 = vset.pattern.permute.xlu0 0
  %459 = vperm.xlu0 %458, %v405
  %v460 = vpop.permute.xlu0 %459
  %463 = vset.pattern.permute.xlu0 0
  %464 = vperm.xlu0 %463, %v406
  %v465 = vpop.permute.xlu0 %464
  %468 = vset.pattern.permute.xlu0 0
  %469 = vperm.xlu0 %468, %v407
  %v470 = vpop.permute.xlu0 %469
  %473 = vset.pattern.permute.xlu0 0
  %474 = vperm.xlu0 %473, %v408
  %v475 = vpop.permute.xlu0 %474
  %478 = vset.pattern.permute.xlu0 0
  %479 = vperm.xlu0 %478, %v409
  %v480 = vpop.permute.xlu0 %479
  %483 = vset.pattern.permute.xlu0 0
  %484 = vperm.xlu0 %483, %v410
  %v485 = vpop.permute.xlu0 %484
  %488 = vset.pattern.permute.xlu0 0
  %489 = vperm.xlu0 %488, %v411
  %v490 = vpop.permute.xlu0 %489
  %v508 = vunpack.c.l.b16 %v372
  %v509 = vunpack.c.l.b16 %v373
  %v510 = vunpack.c.l.b16 %v374
  %v511 = vunpack.c.l.b16 %v375
  %v512 = vunpack.c.l.b16 %v376
  %v513 = vunpack.c.l.b16 %v377
  %v514 = vunpack.c.l.b16 %v378
  %v515 = vunpack.c.l.b16 %v379
  %v516 = vunpack.c.l.b16 %v380
  %v517 = vunpack.c.l.b16 %v381
  %v518 = vunpack.c.l.b16 %v382
  %v519 = vunpack.c.l.b16 %v383
  %v520 = vunpack.c.l.b16 %v384
  %v521 = vunpack.c.l.b16 %v385
  %v522 = vunpack.c.l.b16 %v386
  %v523 = vunpack.c.l.b16 %v387
  %v524 = vpack.c.b16 %v509, %v508
  %v525 = vpack.c.b16 %v511, %v510
  %v526 = vpack.c.b16 %v513, %v512
  %v527 = vpack.c.b16 %v515, %v514
  %v528 = vpack.c.b16 %v517, %v516
  %v529 = vpack.c.b16 %v519, %v518
  %v530 = vpack.c.b16 %v521, %v520
  %v531 = vpack.c.b16 %v523, %v522
  %540 = vmatprep.subr.bf16.mxu0 0
  %541 = vmatpush1.bf16.msra.mxu0 %v395
  %542 = vmatprep.subr.bf16.mxu0 0
  %543 = vmatpush1.bf16.msra.mxu0 %v394
  %544 = vmatprep.subr.bf16.mxu0 0
  %545 = vmatpush1.bf16.msra.mxu0 %v393
  %546 = vmatprep.subr.bf16.mxu0 0
  %547 = vmatpush1.bf16.msra.mxu0 %v392
  %548 = vmatprep.subr.bf16.mxu0 0
  %549 = vmatpush1.bf16.msra.mxu0 %v391
  %550 = vmatprep.subr.bf16.mxu0 0
  %551 = vmatpush1.bf16.msra.mxu0 %v390
  %552 = vmatprep.subr.bf16.mxu0 0
  %553 = vmatpush1.bf16.msra.mxu0 %v389
  %554 = vmatprep.subr.bf16.mxu0 0
  %555 = vmatpush1.bf16.msra.mxu0 %v388
  %556 = vmatprep.subr.bf16.mxu0 0
  %557 = vmatpush2.bf16.msra.mxu0 0
  %558 = vmatprep.subr.bf16.mxu0 0
  %559 = vmatpush2.bf16.msra.mxu0 0
  %560 = vmatprep.subr.bf16.mxu0 0
  %561 = vmatpush2.bf16.msra.mxu0 0
  %562 = vmatprep.subr.bf16.mxu0 0
  %563 = vmatpush2.bf16.msra.mxu0 0
  %564 = vmatprep.subr.bf16.mxu0 0
  %565 = vmatpush2.bf16.msra.mxu0 0
  %566 = vmatprep.subr.bf16.mxu0 0
  %567 = vmatpush2.bf16.msra.mxu0 0
  %568 = vmatprep.subr.bf16.mxu0 0
  %569 = vmatpush2.bf16.msra.mxu0 0
  %570 = vmatprep.subr.bf16.mxu0 0
  %571 = vmatpush2.bf16.msra.mxu0 0
  %572 = vmatprep.mubr.bf16.mxu0 0
  %573 = vmatmul.mubr.bf16.gmra.mxu0 %v524
  %v574 = vpop.f32.mrf.mxu0
  %v575 = vadd.f32 %v415, %v574
  %v576 = vpop.f32.mrf.mxu0
  %v577 = vpop.f32.mrf.mxu0
  %v578 = vadd.f32 %v420, %v577
  %v579 = vpop.f32.mrf.mxu0
  %580 = vmatprep.mubr.bf16.mxu0 0
  %581 = vmatmul.mubr.bf16.gmra.mxu0 %v525
  %v582 = vpop.f32.mrf.mxu0
  %v583 = vadd.f32 %v425, %v582
  %v584 = vpop.f32.mrf.mxu0
  %v585 = vpop.f32.mrf.mxu0
  %v586 = vadd.f32 %v430, %v585
  %v587 = vpop.f32.mrf.mxu0
  %588 = vmatprep.mubr.bf16.mxu0 0
  %589 = vmatmul.mubr.bf16.gmra.mxu0 %v526
  %v590 = vpop.f32.mrf.mxu0
  %v591 = vadd.f32 %v435, %v590
  %v592 = vpop.f32.mrf.mxu0
  %v593 = vpop.f32.mrf.mxu0
  %v594 = vadd.f32 %v440, %v593
  %v595 = vpop.f32.mrf.mxu0
  %596 = vmatprep.mubr.bf16.mxu0 0
  %597 = vmatmul.mubr.bf16.gmra.mxu0 %v527
  %v598 = vpop.f32.mrf.mxu0
  %v599 = vadd.f32 %v445, %v598
  %v600 = vpop.f32.mrf.mxu0
  %v601 = vpop.f32.mrf.mxu0
  %v602 = vadd.f32 %v450, %v601
  %v603 = vpop.f32.mrf.mxu0
  %604 = vmatprep.mubr.bf16.mxu0 0
  %605 = vmatmul.mubr.bf16.gmra.mxu0 %v528
  %v606 = vpop.f32.mrf.mxu0
  %v607 = vadd.f32 %v455, %v606
  %v608 = vpop.f32.mrf.mxu0
  %v609 = vpop.f32.mrf.mxu0
  %v610 = vadd.f32 %v460, %v609
  %v611 = vpop.f32.mrf.mxu0
  %612 = vmatprep.mubr.bf16.mxu0 0
  %613 = vmatmul.mubr.bf16.gmra.mxu0 %v529
  %v614 = vpop.f32.mrf.mxu0
  %v615 = vadd.f32 %v465, %v614
  %v616 = vpop.f32.mrf.mxu0
  %v617 = vpop.f32.mrf.mxu0
  %v618 = vadd.f32 %v470, %v617
  %v619 = vpop.f32.mrf.mxu0
  %620 = vmatprep.mubr.bf16.mxu0 0
  %621 = vmatmul.mubr.bf16.gmra.mxu0 %v530
  %v622 = vpop.f32.mrf.mxu0
  %v623 = vadd.f32 %v475, %v622
  %v624 = vpop.f32.mrf.mxu0
  %v625 = vpop.f32.mrf.mxu0
  %v626 = vadd.f32 %v480, %v625
  %v627 = vpop.f32.mrf.mxu0
  %628 = vmatprep.mubr.bf16.mxu0 0
  %629 = vmatmul.mubr.bf16.gmra.mxu0 %v531
  %v630 = vpop.f32.mrf.mxu0
  %v631 = vadd.f32 %v485, %v630
  %v632 = vpop.f32.mrf.mxu0
  %v633 = vpop.f32.mrf.mxu0
  %v634 = vadd.f32 %v490, %v633
  %v635 = vpop.f32.mrf.mxu0
  %636 = vdwg.mxu0
  %v637 = vmax.f32 %v575, 0.0
  %v638 = vmax.f32 %v578, 0.0
  %v639 = vmax.f32 %v583, 0.0
  %v640 = vmax.f32 %v586, 0.0
  %v641 = vmax.f32 %v591, 0.0
  %v642 = vmax.f32 %v594, 0.0
  %v643 = vmax.f32 %v599, 0.0
  %v644 = vmax.f32 %v602, 0.0
  %v645 = vmax.f32 %v607, 0.0
  %v646 = vmax.f32 %v610, 0.0
  %v647 = vmax.f32 %v615, 0.0
  %v648 = vmax.f32 %v618, 0.0
  %v649 = vmax.f32 %v623, 0.0
  %v650 = vmax.f32 %v626, 0.0
  %v651 = vmax.f32 %v631, 0.0
  %v652 = vmax.f32 %v634, 0.0
  %v653 = vld [vmem:[%s5] sm:$0x1]
  %v654 = vpack.c.bf16 %v638, %v637
  %v655 = vpack.c.bf16 %v640, %v639
  %v656 = vpack.c.bf16 %v642, %v641
  %v657 = vpack.c.bf16 %v644, %v643
  %v658 = vpack.c.bf16 %v646, %v645
  %v659 = vpack.c.bf16 %v648, %v647
  %v660 = vpack.c.bf16 %v650, %v649
  %v661 = vpack.c.bf16 %v652, %v651
  %v662 = vld [vmem:[%s6] sm:$0x3]
  %664 = vset.pattern.permute.xlu0 0
  %665 = vperm.xlu0 %664, %v662
  %v666 = vpop.permute.xlu0 %665
  %668 = vmatprep.subr.bf16.mxu0 0
  %669 = vmatpush1.bf16.msra.mxu0 %v661
  %670 = vmatprep.subr.bf16.mxu0 0
  %671 = vmatpush1.bf16.msra.mxu0 %v660
  %672 = vmatprep.subr.bf16.mxu0 0
  %673 = vmatpush1.bf16.msra.mxu0 %v659
  %674 = vmatprep.subr.bf16.mxu0 0
  %675 = vmatpush1.bf16.msra.mxu0 %v658
  %676 = vmatprep.subr.bf16.mxu0 0
  %677 = vmatpush1.bf16.msra.mxu0 %v657
  %678 = vmatprep.subr.bf16.mxu0 0
  %679 = vmatpush1.bf16.msra.mxu0 %v656
  %680 = vmatprep.subr.bf16.mxu0 0
  %681 = vmatpush1.bf16.msra.mxu0 %v655
  %682 = vmatprep.subr.bf16.mxu0 0
  %683 = vmatpush1.bf16.msra.mxu0 %v654
  %684 = vmatprep.subr.bf16.mxu0 0
  %685 = vmatpush2.bf16.msra.mxu0 0
  %686 = vmatprep.subr.bf16.mxu0 0
  %687 = vmatpush2.bf16.msra.mxu0 0
  %688 = vmatprep.subr.bf16.mxu0 0
  %689 = vmatpush2.bf16.msra.mxu0 0
  %690 = vmatprep.subr.bf16.mxu0 0
  %691 = vmatpush2.bf16.msra.mxu0 0
  %692 = vmatprep.subr.bf16.mxu0 0
  %693 = vmatpush2.bf16.msra.mxu0 0
  %694 = vmatprep.subr.bf16.mxu0 0
  %695 = vmatpush2.bf16.msra.mxu0 0
  %696 = vmatprep.subr.bf16.mxu0 0
  %697 = vmatpush2.bf16.msra.mxu0 0
  %698 = vmatprep.subr.bf16.mxu0 0
  %699 = vmatpush2.bf16.msra.mxu0 0
  %700 = vmatprep.mubr.bf16.mxu0 0
  %701 = vmatmul.mubr.bf16.gmra.mxu0 %v653
  %v702 = vpop.f32.mrf.mxu0
  %v703 = vadd.f32 %v666, %v702
  %v704 = vpop.f32.mrf.mxu0
  %v705 = vpop.f32.mrf.mxu0
  %v706 = vpop.f32.mrf.mxu0
  %707 = vdwg.mxu0
  %708 = vst [vmem:[%s7] sm:$0x3] %v703
  // Predicated region
  $region30: #{net_forward.1} parent=0 // pred_check
    _
  $region31: #{net_forward.1} parent=0 // pred_check_branch
    %710 = sbr.rel (0) target = $region33
  $region32: #{net_forward.1} parent=0 // pred_region
    _
  $region33: #{net_forward.1} parent=0 // pred_fallthru
    _
  // Predicated region
  $region34: #{net_forward.1} parent=0 // pred_check
    _
  $region35: #{net_forward.1} parent=0 // pred_check_branch
    %712 = sbr.rel (0) target = $region37
  $region36: #{net_forward.1} parent=0 // pred_region
    _
  $region37: #{net_forward.1} parent=0 // pred_fallthru
    _

</llo_original>
